<compile_context>
chip_gen: v7x
topology: tpu7x:2x2x1
jax: 0.10.0
libtpu: 0.0.40
codegen_flags: <defaults>
</compile_context>

<pallas_src>
import numpy as np
import jax
import jax.numpy as jnp
from jax import lax
from jax.experimental import pallas as pl
from jax.experimental.pallas import tpu as pltpu


_VMEM_LIMIT = 32 * 1024 * 1024
_PAR = pltpu.CompilerParams(dimension_semantics=("parallel",),
                            vmem_limit_bytes=_VMEM_LIMIT)
_ARB = pltpu.CompilerParams(dimension_semantics=("arbitrary",),
                            vmem_limit_bytes=_VMEM_LIMIT)

# contract the LAST dims of both operands (i.e. A @ B.T), as in flash attention.
_NT_DIMS = (((1,), (1,)), ((), ()))


# ----------------------------------------------------------------------------
# Kernel 1: batched linear  out[g] = x[g] @ w[g] + b[g]   (bf16 in, f32 out)
# ----------------------------------------------------------------------------
def _proj_kernel(x_ref, w_ref, b_ref, o_ref):
    o_ref[...] = (
        jnp.dot(x_ref[...], w_ref[...], preferred_element_type=jnp.float32)
        + b_ref[...]
    )


def pallas_proj(x_bf, w_bf, b_f32):
    G, M, K = x_bf.shape
    N = w_bf.shape[-1]
    return pl.pallas_call(
        _proj_kernel,
        out_shape=jax.ShapeDtypeStruct((G, M, N), jnp.float32),
        grid=(G,),
        in_specs=[
            pl.BlockSpec((None, M, K), lambda g: (g, 0, 0)),
            pl.BlockSpec((None, K, N), lambda g: (g, 0, 0)),
            pl.BlockSpec((None, 1, N), lambda g: (g, 0, 0)),
        ],
        out_specs=pl.BlockSpec((None, M, N), lambda g: (g, 0, 0)),
        compiler_params=_PAR,
    )(x_bf, w_bf, b_f32)


# ----------------------------------------------------------------------------
# Kernel 2: GAT-style attention logits, batched over (side, metapath) pairs.
#   e[h, e] = LeakyReLU( sum_k a_cat[h, k] * cat[k, e] , 0.2 )
# Single concatenated dot; output is lane-dense (edges on the lane axis).
# ----------------------------------------------------------------------------
def _attn_logits_kernel(a_ref, cat_ref, o_ref):
    e = jnp.dot(a_ref[...], cat_ref[...], preferred_element_type=jnp.float32)
    o_ref[...] = jnp.where(e > 0.0, e, 0.2 * e)          # LeakyReLU(0.2), f32


def pallas_attn_logits(a_cat_bf, cat_T_bf):
    P, H, K2 = a_cat_bf.shape
    E = cat_T_bf.shape[-1]
    return pl.pallas_call(
        _attn_logits_kernel,
        out_shape=jax.ShapeDtypeStruct((P, H, E), jnp.float32),
        grid=(P,),
        in_specs=[
            pl.BlockSpec((None, H, K2), lambda p: (p, 0, 0)),
            pl.BlockSpec((None, K2, E), lambda p: (p, 0, 0)),
        ],
        out_specs=pl.BlockSpec((None, H, E), lambda p: (p, 0, 0)),
        compiler_params=_PAR,
    )(a_cat_bf, cat_T_bf)


# ----------------------------------------------------------------------------
# Kernel 3: fused exp(softmax prep) + segment-softmax denominator + neighbor
#           aggregation + normalization + ELU, batched over (side, metapath).
#   exp[h,e]      = exp(e[h,e] - segmax[dst[e],h])            (fused, EUP, f32)
#   denom[t,h]    = sum_e A[t,e] * exp[h,e]
#   num[t,h*D+d]  = sum_e A[t,e] * exp[h,e] * edata[d,e]
#   out[t,:]      = ELU( num * 1/(denom+1e-9) broadcast )     (lane-dense HD)
# expand_T / tile_T / expand are constant 0/1 matrices used to broadcast per-head
# / per-feature values across the fused (H*D) axis via cheap MXU matmuls.
# ----------------------------------------------------------------------------
def _segment_agg_kernel(e_ref, mx_ref, a_ref, cat_ref, expt_ref, tilet_ref,
                        expand_ref, o_ref):
    D = cat_ref.shape[0] // 2

    exp_t = jnp.exp(e_ref[...] - mx_ref[...])             # (H, E) f32, EUP
    exp_b = exp_t.astype(jnp.bfloat16)
    A = a_ref[...]                                        # (n_t, E) bf16

    denom = lax.dot_general(A, exp_b, _NT_DIMS,
                            preferred_element_type=jnp.float32)       # (n_t, H)

    edata_t = cat_ref[D:, :]                              # (D, E) bf16
    expf_t = jnp.dot(expt_ref[...], exp_b,
                     preferred_element_type=jnp.float32)              # (HD, E)
    edup_t = jnp.dot(tilet_ref[...], edata_t,
                     preferred_element_type=jnp.float32)              # (HD, E)
    weighted_b = (expf_t * edup_t).astype(jnp.bfloat16)               # (HD, E)

    num = lax.dot_general(A, weighted_b, _NT_DIMS,
                          preferred_element_type=jnp.float32)         # (n_t, HD)

    recip = pl.reciprocal(denom + 1e-9, approx=True)                  # f32
    scale = jnp.dot(recip.astype(jnp.bfloat16), expand_ref[...],
                    preferred_element_type=jnp.float32)               # (n_t, HD)
    agg = num * scale
    # ELU fused in-kernel, f32 (min() keeps the inactive exp branch finite).
    o_ref[...] = jnp.where(agg > 0.0, agg, jnp.exp(jnp.minimum(agg, 0.0)) - 1.0)


def pallas_segment_agg(e_all, maxg_all, A_bf, cat_T_bf, expand_T, tile_T, expand):
    P, H, E = e_all.shape
    n_t = A_bf.shape[1]
    twoD = cat_T_bf.shape[1]
    D = twoD // 2
    HD = expand.shape[1]
    return pl.pallas_call(
        _segment_agg_kernel,
        out_shape=jax.ShapeDtypeStruct((P, n_t, HD), jnp.float32),
        grid=(P,),
        in_specs=[
            pl.BlockSpec((None, H, E), lambda p: (p, 0, 0)),
            pl.BlockSpec((None, H, E), lambda p: (p, 0, 0)),
            pl.BlockSpec((None, n_t, E), lambda p: (p, 0, 0)),
            pl.BlockSpec((None, twoD, E), lambda p: (p, 0, 0)),
            pl.BlockSpec((HD, H), lambda p: (0, 0)),
            pl.BlockSpec((HD, D), lambda p: (0, 0)),
            pl.BlockSpec((H, HD), lambda p: (0, 0)),
        ],
        out_specs=pl.BlockSpec((None, n_t, HD), lambda p: (p, 0, 0)),
        compiler_params=_PAR,
    )(e_all, maxg_all, A_bf, cat_T_bf, expand_T, tile_T, expand)


# ----------------------------------------------------------------------------
# Kernel 4: fused semantic attention head for ALL metapaths/sides at once.
#   s1 = tanh(x @ w1 + b1); per-path mean via a constant averaging matrix (MXU);
#   fc2 (N=1) computed as a VPU multiply-reduce (no 1-lane MXU matmul).
# ----------------------------------------------------------------------------
def _semantic_score_kernel(x_ref, w1_ref, b1_ref, avg_ref, w2_ref, b2_ref, o_ref):
    s1 = jnp.tanh(
        jnp.dot(x_ref[...], w1_ref[...], preferred_element_type=jnp.float32)
        + b1_ref[...])                                                 # (R, AV) f32
    m = jnp.dot(avg_ref[...], s1.astype(jnp.bfloat16),
                preferred_element_type=jnp.float32)                    # (P, AV)
    o_ref[...] = jnp.sum(m * w2_ref[...], axis=-1, keepdims=True) + b2_ref[...]


def pallas_semantic_scores(x_bf, w1_bf, b1_f, avg_bf, w2_f, b2_f):
    R, K = x_bf.shape
    AV = w1_bf.shape[-1]
    P = avg_bf.shape[0]
    return pl.pallas_call(
        _semantic_score_kernel,
        out_shape=jax.ShapeDtypeStruct((P, 1), jnp.float32),
        grid=(1,),
        in_specs=[
            pl.BlockSpec((R, K), lambda i: (0, 0)),
            pl.BlockSpec((K, AV), lambda i: (0, 0)),
            pl.BlockSpec((1, AV), lambda i: (0, 0)),
            pl.BlockSpec((P, R), lambda i: (0, 0)),
            pl.BlockSpec((1, AV), lambda i: (0, 0)),
            pl.BlockSpec((1, 1), lambda i: (0, 0)),
        ],
        out_specs=pl.BlockSpec((P, 1), lambda i: (0, 0)),
        compiler_params=_ARB,
    )(x_bf, w1_bf, b1_f, avg_bf, w2_f, b2_f)


# ----------------------------------------------------------------------------
# Kernel 5: fused beta-weighted metapath combine + fc_drug for BOTH drug sides.
#   h      = C @ agg_flat            (C encodes beta, block-diagonal over sides)
#   logits = h @ W_drug + b_drug
# ----------------------------------------------------------------------------
def _combine_fc_kernel(c_ref, x_ref, w_ref, b_ref, h_ref, o_ref):
    h = jnp.dot(c_ref[...], x_ref[...], preferred_element_type=jnp.float32)
    h_ref[...] = h
    o_ref[...] = (jnp.dot(h.astype(jnp.bfloat16), w_ref[...],
                          preferred_element_type=jnp.float32) + b_ref[...])


def pallas_combine_fc(C_bf, x_bf, w_bf, b_f):
    Rn, R = C_bf.shape
    HD = x_bf.shape[-1]
    O = w_bf.shape[-1]
    return pl.pallas_call(
        _combine_fc_kernel,
        out_shape=(jax.ShapeDtypeStruct((Rn, HD), jnp.float32),
                   jax.ShapeDtypeStruct((Rn, O), jnp.float32)),
        grid=(1,),
        in_specs=[
            pl.BlockSpec((Rn, R), lambda i: (0, 0)),
            pl.BlockSpec((R, HD), lambda i: (0, 0)),
            pl.BlockSpec((HD, O), lambda i: (0, 0)),
            pl.BlockSpec((1, O), lambda i: (0, 0)),
        ],
        out_specs=[pl.BlockSpec((Rn, HD), lambda i: (0, 0)),
                   pl.BlockSpec((Rn, O), lambda i: (0, 0))],
        compiler_params=_ARB,
    )(C_bf, x_bf, w_bf, b_f)


# ----------------------------------------------------------------------------
# Parameter init (deterministic, Xavier-normal like the PyTorch module)
# ----------------------------------------------------------------------------
def xavier_normal(key, shape, gain=1.414):
    fan_out, fan_in = shape
    std = gain * np.sqrt(2.0 / (fan_in + fan_out))
    return (std * jax.random.normal(key, shape)).astype(jnp.float32)


def init_params(key, feats_dim_list, hidden_dim, out_dim, num_heads,
                attn_vec_dim, num_metapaths):
    ks = jax.random.split(key, 10)
    params = {}
    params["fc_list"] = []
    for i, fd in enumerate(feats_dim_list):
        W = xavier_normal(ks[i], (hidden_dim, fd))
        b = jnp.zeros((hidden_dim,), jnp.float32)
        params["fc_list"].append((W, b))
    # drug_layer (ntype_specific) parameters — shared across both drug sides
    params["attn1"] = (0.1 * jax.random.normal(
        ks[4], (num_metapaths, num_heads, hidden_dim))).astype(jnp.float32)
    params["attn2"] = (0.1 * jax.random.normal(
        ks[5], (num_metapaths, num_heads, hidden_dim))).astype(jnp.float32)
    params["fc1_W"] = xavier_normal(ks[6], (attn_vec_dim, num_heads * hidden_dim))
    params["fc1_b"] = jnp.zeros((attn_vec_dim,), jnp.float32)
    params["fc2_W"] = xavier_normal(ks[7], (1, attn_vec_dim))
    params["fc2_b"] = jnp.zeros((1,), jnp.float32)
    params["fc_drug_W"] = xavier_normal(ks[8], (out_dim, num_heads * hidden_dim))
    params["fc_drug_b"] = jnp.zeros((out_dim,), jnp.float32)
    return params


# ----------------------------------------------------------------------------
# link_prediction forward (fused / batched)
# ----------------------------------------------------------------------------
def link_prediction_forward(params, inputs, hidden_dim, num_heads):
    g_lists, features_list, type_mask, edge_idx_lists, target_idx_lists = inputs
    n_total = type_mask.shape[0]
    num_types = len(features_list)
    num_sides = len(edge_idx_lists)
    num_mp = len(edge_idx_lists[0])
    n_t = int(target_idx_lists[0].shape[0])
    # TODO(synk): ragged per-side target counts not supported (both sides share n_t).
    assert all(int(t.shape[0]) == n_t for t in target_idx_lists)
    P = num_sides * num_mp
    HD = num_heads * hidden_dim

    # --- 1) per-node-type projection: ONE batched call, bf16 operands ---
    # TODO(synk): replace pad-to-max with ragged PrefetchScalarGridSpec tiling at scale.
    m_max = max(int(f.shape[0]) for f in features_list)
    k_max = max(int(f.shape[1]) for f in features_list)
    x_stk = jnp.stack([
        jnp.pad(jnp.asarray(f, jnp.float32),
                ((0, m_max - f.shape[0]), (0, k_max - f.shape[1])))
        for f in features_list]).astype(jnp.bfloat16)                 # (T, m_max, k_max)
    w_stk = jnp.stack([
        jnp.pad(W.T, ((0, k_max - W.shape[1]), (0, 0)))
        for (W, _) in params["fc_list"]]).astype(jnp.bfloat16)        # (T, k_max, hidden)
    b_stk = jnp.stack([b.reshape(1, hidden_dim) for (_, b) in params["fc_list"]])
    proj = pallas_proj(x_stk, w_stk, b_stk)                           # (T, m_max, hidden) f32

    transformed = jnp.zeros((n_total, hidden_dim), jnp.float32)
    for i in range(num_types):
        node_idx = np.where(np.asarray(type_mask) == i)[0]            # host-side, like torch
        transformed = transformed.at[node_idx].set(proj[i, :len(node_idx)])
    # feat_drop (dropout) in eval mode is identity.

    # --- 2) gather per (side, metapath) pair; pad edge count to E_max; stack ---
    # TODO(synk): ntype_specific source was not provided; the rnn_type='rnn'
    # metapath-instance encoder is approximated by a mean over metapath node features.
    E_max = max(int(edge_idx_lists[s][m].shape[0])
                for s in range(num_sides) for m in range(num_mp))
    catT_l, A_l, dst_l, aT_l = [], [], [], []
    for s in range(num_sides):
        tgt = jnp.asarray(target_idx_lists[s])
        for m in range(num_mp):
            eidx = jnp.asarray(edge_idx_lists[s][m])                  # (E, L)
            dst = jnp.asarray(g_lists[s][m])                          # (E,)
            E = int(eidx.shape[0])
            edata = jnp.mean(transformed[eidx], axis=1)               # (E, D)
            center = transformed[tgt][dst]                            # (E, D)
            pad = E_max - E
            cat = jnp.pad(jnp.concatenate([center, edata], axis=1),
                          ((0, pad), (0, 0)))                         # (E_max, 2D)
            dstp = jnp.pad(dst, (0, pad), constant_values=n_t)        # pad -> dummy segment
            catT_l.append(cat.T)                                      # (2D, E_max)
            A_l.append((dstp[None, :] == jnp.arange(n_t)[:, None]).astype(jnp.float32))
            dst_l.append(dstp)
            aT_l.append(jnp.concatenate(
                [params["attn1"][m], params["attn2"][m]], axis=1))    # (H, 2D)
    cat_T = jnp.stack(catT_l).astype(jnp.bfloat16)                    # (P, 2D, E_max)
    A_bf = jnp.stack(A_l).astype(jnp.bfloat16)                        # (P, n_t, E_max)
    dst_all = jnp.stack(dst_l)                                        # (P, E_max)
    a_cat = jnp.stack(aT_l).astype(jnp.bfloat16)                      # (P, H, 2D)

    # --- 3) attention logits: ONE call, single concatenated dot, lane-dense (H,E) ---
    e_all = pallas_attn_logits(a_cat, cat_T)                          # (P, H, E_max) f32

    # per-destination max (segment_max glue) + gather back to edges (stays in (H,E) domain)
    smax = jax.vmap(jax.vmap(
        lambda ee, dd: jax.ops.segment_max(ee, dd, num_segments=n_t + 1),
        in_axes=(0, None)), in_axes=(0, 0))(e_all, dst_all)           # (P, H, n_t+1)
    idx = jnp.broadcast_to(dst_all[:, None, :], e_all.shape)
    maxg = jnp.take_along_axis(smax, idx, axis=2)                     # (P, H, E_max)

    # --- 4) fused exp + denom + aggregation + normalize + ELU: ONE batched call ---
    expand = jnp.kron(jnp.eye(num_heads, dtype=jnp.float32),
                      jnp.ones((1, hidden_dim), jnp.float32))         # (H, HD)
    expand_T = expand.T.astype(jnp.bfloat16)                          # (HD, H)
    tile_T = jnp.tile(jnp.eye(hidden_dim, dtype=jnp.float32),
                      (num_heads, 1)).astype(jnp.bfloat16)            # (HD, D)
    # TODO(synk): dense one-hot A is the long-term scaling ceiling; replace with a
    # destination-sorted-edge + scalar-prefetch variant at graph scale.
    agg_all = pallas_segment_agg(e_all, maxg, A_bf, cat_T, expand_T, tile_T,
                                 expand.astype(jnp.bfloat16))         # (P, n_t, HD) f32

    # --- 5) semantic attention scores (fc1 + tanh + per-path mean + fc2): ONE call ---
    agg_flat_b = agg_all.reshape(P * n_t, HD).astype(jnp.bfloat16)
    avg = jnp.kron(jnp.eye(P, dtype=jnp.float32),
                   jnp.ones((1, n_t), jnp.float32) / float(n_t)).astype(jnp.bfloat16)
    scores = pallas_semantic_scores(
        agg_flat_b, params["fc1_W"].T.astype(jnp.bfloat16),
        params["fc1_b"].reshape(1, -1), avg,
        params["fc2_W"].reshape(1, -1), params["fc2_b"].reshape(1, 1))  # (P, 1) f32

    beta = jax.nn.softmax(scores.reshape(num_sides, num_mp), axis=1)  # f32

    # --- 6) beta-weighted combine + fc_drug for BOTH sides fused: ONE call ---
    blocks = [jnp.kron(beta[s:s + 1, :], jnp.eye(n_t, dtype=jnp.float32))
              for s in range(num_sides)]
    C = jax.scipy.linalg.block_diag(*blocks).astype(jnp.bfloat16)     # (sides*n_t, P*n_t)
    h_both, logits = pallas_combine_fc(
        C, agg_flat_b, params["fc_drug_W"].T.astype(jnp.bfloat16),
        params["fc_drug_b"].reshape(1, -1))

    logits_list = [logits[s * n_t:(s + 1) * n_t] for s in range(num_sides)]
    h_list = [h_both[s * n_t:(s + 1) * n_t] for s in range(num_sides)]
    atten_list = [beta[s] for s in range(num_sides)]
    return (logits_list, h_list, atten_list)


# ----------------------------------------------------------------------------
# Pure-JAX f32 reference (mirrors the original un-fused formulation) for validation
# ----------------------------------------------------------------------------
def _reference_forward(params, inputs, hidden_dim, num_heads):
    g_lists, features_list, type_mask, edge_idx_lists, target_idx_lists = inputs
    n_total = type_mask.shape[0]
    transformed = jnp.zeros((n_total, hidden_dim), jnp.float32)
    for i, (W, b) in enumerate(params["fc_list"]):
        node_idx = np.where(np.asarray(type_mask) == i)[0]
        transformed = transformed.at[node_idx].set(
            jnp.asarray(features_list[i], jnp.float32) @ W.T + b)
    logits, hs, atts = [], [], []
    for side in range(2):
        tgt = jnp.asarray(target_idx_lists[side])
        n_t = tgt.shape[0]
        metapath_outs = []
        for m in range(len(edge_idx_lists[side])):
            eidx = jnp.asarray(edge_idx_lists[side][m])
            dst = jnp.asarray(g_lists[side][m])
            E = eidx.shape[0]
            edata = jnp.mean(transformed[eidx], axis=1)
            center = transformed[tgt][dst]
            a1 = params["attn1"][m]
            a2 = params["attn2"][m]
            e = jax.nn.leaky_relu(center @ a1.T + edata @ a2.T, 0.2)
            A = (dst[None, :] == jnp.arange(n_t)[:, None]).astype(jnp.float32)
            seg_max = jnp.max(jnp.where(A[:, :, None] > 0, e[None], -jnp.inf), axis=1)
            exp_e = jnp.exp(e - seg_max[dst])
            denom = A @ exp_e
            alpha = exp_e / (denom[dst] + 1e-9)
            weighted = (alpha[:, :, None] * edata[:, None, :]).reshape(
                E, num_heads * hidden_dim)
            metapath_outs.append(jax.nn.elu(A @ weighted))
        scores = []
        for outm in metapath_outs:
            s = jnp.tanh(outm @ params["fc1_W"].T + params["fc1_b"])
            s = s @ params["fc2_W"].T + params["fc2_b"]
            scores.append(jnp.mean(s))
        beta = jax.nn.softmax(jnp.stack(scores))
        h = sum(beta[m] * metapath_outs[m] for m in range(len(metapath_outs)))
        logits.append(h @ params["fc_drug_W"].T + params["fc_drug_b"])
        hs.append(h)
        atts.append(beta)
    return logits, hs, atts


# ----------------------------------------------------------------------------
if __name__ == "__main__":
    key = jax.random.PRNGKey(0)

    # model config
    feats_dim_list = [10, 12]         # 2 node types
    hidden_dim = 32
    out_dim = 16
    num_heads = 4
    attn_vec_dim = 16
    num_metapaths_list = [2]          # drug layer: 2 metapaths
    num_metapaths = num_metapaths_list[0]

    params = init_params(key, feats_dim_list, hidden_dim, out_dim, num_heads,
                         attn_vec_dim, num_metapaths)

    # synthetic graph inputs
    n_type0, n_type1 = 8, 12
    n_total = n_type0 + n_type1
    type_mask = np.array([0] * n_type0 + [1] * n_type1, dtype=np.int32)

    k1, k2 = jax.random.split(jax.random.PRNGKey(1), 2)
    features_list = [
        jax.random.normal(k1, (n_type0, feats_dim_list[0]), jnp.float32),
        jax.random.normal(k2, (n_type1, feats_dim_list[1]), jnp.float32),
    ]

    E, L = 6, 3
    n_targets = 3
    target_idx_lists = [jnp.array([0, 2, 5], jnp.int32),
                        jnp.array([1, 3, 7], jnp.int32)]
    edge_idx_lists = []
    g_lists = []
    rng = np.random.RandomState(0)
    for _side in range(2):
        side_edges, side_g = [], []
        for _m in range(num_metapaths):
            side_edges.append(jnp.asarray(
                rng.randint(0, n_total, size=(E, L)), jnp.int32))
            # each target gets 2 metapath instances (dense coverage avoids empty segments)
            side_g.append(jnp.array([0, 0, 1, 1, 2, 2], jnp.int32))
        edge_idx_lists.append(side_edges)
        g_lists.append(side_g)

    inputs = (g_lists, features_list, type_mask, edge_idx_lists, target_idx_lists)

    out = link_prediction_forward(params, inputs, hidden_dim, num_heads)
    out = jax.block_until_ready(out)
    (logits, h_drugs, attens) = out

    # shape + finiteness checks
    assert logits[0].shape == (n_targets, out_dim)
    assert h_drugs[0].shape == (n_targets, num_heads * hidden_dim)
    assert attens[0].shape == (num_metapaths,)
    assert all(np.isfinite(np.asarray(x)).all() for x in logits)

    # numerical check against the un-fused pure-JAX f32 reference
    ref_logits, ref_h, ref_att = _reference_forward(params, inputs, hidden_dim, num_heads)
    for s in range(2):
        np.testing.assert_allclose(np.asarray(logits[s]), np.asarray(ref_logits[s]),
                                   rtol=5e-2, atol=5e-2)
        np.testing.assert_allclose(np.asarray(h_drugs[s]), np.asarray(ref_h[s]),
                                   rtol=5e-2, atol=5e-2)
        np.testing.assert_allclose(np.asarray(attens[s]), np.asarray(ref_att[s]),
                                   rtol=5e-2, atol=5e-2)

    print("KERNEL_OK")
</pallas_src>

<mosaic_0001>
module attributes {stable_mosaic.version = 11 : i64} {
  func.func @_proj_kernel(%arg0: i32, %arg1: memref<1x12x12xbf16, #tpu.memory_space<vmem>>, %arg2: memref<1x12x32xbf16, #tpu.memory_space<vmem>>, %arg3: memref<1x1x32xf32, #tpu.memory_space<vmem>>, %arg4: memref<1x12x32xf32, #tpu.memory_space<vmem>>) attributes {dimension_semantics = [#tpu.dimension_semantics<parallel>], iteration_bounds = array<i64: 2>, scalar_prefetch = 0 : i64, scratch_operands = 0 : i64, tpu.core_type = #tpu.core_type<tc>, window_params = [{transform_indices = @transform_0, window_bounds = array<i64: 1, 12, 12>}, {transform_indices = @transform_1, window_bounds = array<i64: 1, 12, 32>}, {transform_indices = @transform_2, window_bounds = array<i64: 1, 1, 32>}, {transform_indices = @transform_3, window_bounds = array<i64: 1, 12, 32>}]} {
    %c0 = arith.constant 0 : index
    %c0_0 = arith.constant 0 : index
    %c0_1 = arith.constant 0 : index
    %0 = vector.load %arg1[%c0, %c0_0, %c0_1] : memref<1x12x12xbf16, #tpu.memory_space<vmem>>, vector<1x12x12xbf16>
    %1 = vector.shape_cast %0 : vector<1x12x12xbf16> to vector<12x12xbf16>
    %c0_2 = arith.constant 0 : index
    %c0_3 = arith.constant 0 : index
    %c0_4 = arith.constant 0 : index
    %2 = vector.load %arg2[%c0_2, %c0_3, %c0_4] : memref<1x12x32xbf16, #tpu.memory_space<vmem>>, vector<1x12x32xbf16>
    %3 = vector.shape_cast %2 : vector<1x12x32xbf16> to vector<12x32xbf16>
    %cst = arith.constant dense<0.000000e+00> : vector<12x32xf32>
    %4 = tpu.matmul %1, %3, %cst {dimension_numbers = #tpu.dot_dimension_numbers<[1], [0], [0], [1], [0, 0, 1, 1], [], []>} : vector<12x12xbf16>, vector<12x32xbf16>, vector<12x32xf32> -> vector<12x32xf32>
    %c0_5 = arith.constant 0 : index
    %c0_6 = arith.constant 0 : index
    %c0_7 = arith.constant 0 : index
    %5 = vector.load %arg3[%c0_5, %c0_6, %c0_7] : memref<1x1x32xf32, #tpu.memory_space<vmem>>, vector<1x1x32xf32>
    %6 = vector.shape_cast %5 : vector<1x1x32xf32> to vector<1x32xf32>
    %7 = vector.broadcast %6 : vector<1x32xf32> to vector<12x32xf32>
    %8 = arith.addf %4, %7 : vector<12x32xf32>
    %c0_8 = arith.constant 0 : index
    %c0_9 = arith.constant 0 : index
    %c0_10 = arith.constant 0 : index
    %9 = vector.load %arg4[%c0_8, %c0_9, %c0_10] : memref<1x12x32xf32, #tpu.memory_space<vmem>>, vector<1x12x32xf32>
    %10 = vector.shape_cast %9 : vector<1x12x32xf32> to vector<12x32xf32>
    %11 = vector.shape_cast %8 : vector<12x32xf32> to vector<1x12x32xf32>
    tpu.vector_store %arg4[%c0_8, %c0_9, %c0_10], %11 {strides = array<i32>} : memref<1x12x32xf32, #tpu.memory_space<vmem>>, vector<1x12x32xf32>,
    return
  }
  func.func @transform_0(%arg0: i32) -> (i32, i32, i32) {
    %c0_i32 = arith.constant 0 : i32
    %c0_i32_0 = arith.constant 0 : i32
    %c0_i32_1 = arith.constant 0 : i32
    return %arg0, %c0_i32, %c0_i32_0 : i32, i32, i32
  }
  func.func @transform_1(%arg0: i32) -> (i32, i32, i32) {
    %c0_i32 = arith.constant 0 : i32
    %c0_i32_0 = arith.constant 0 : i32
    %c0_i32_1 = arith.constant 0 : i32
    return %arg0, %c0_i32, %c0_i32_0 : i32, i32, i32
  }
  func.func @transform_2(%arg0: i32) -> (i32, i32, i32) {
    %c0_i32 = arith.constant 0 : i32
    %c0_i32_0 = arith.constant 0 : i32
    %c0_i32_1 = arith.constant 0 : i32
    return %arg0, %c0_i32, %c0_i32_0 : i32, i32, i32
  }
  func.func @transform_3(%arg0: i32) -> (i32, i32, i32) {
    %c0_i32 = arith.constant 0 : i32
    %c0_i32_0 = arith.constant 0 : i32
    %c0_i32_1 = arith.constant 0 : i32
    return %arg0, %c0_i32, %c0_i32_0 : i32, i32, i32
  }
}

</mosaic_0001>

<llo_original>
// kernel: tpu_custom_call.1
$region0: #{tpu_custom_call.1}
  #allocation0 [shape = 'u32[]', space=smem, size = 0x4, offset = 0x4, fixed_abs, tag = 'smem constant byte address 0x4 - core index']
  #allocation1 [shape = 'u32[144,128]{1,0:T(1,128)}', space=vmem, size = 0x12000, scoped, tag = 'internal scratch']
  %s0 = inlined_call_operand.vmem [shape: bf16[2,12,12], index: 0, kind: input, shape index: {}]
  %s1 = inlined_call_operand.vmem [shape: bf16[2,12,32], index: 1, kind: input, shape index: {}]
  %s2 = inlined_call_operand.vmem [shape: f32[2,1,32], index: 2, kind: input, shape index: {}]
  %s3 = inlined_call_operand.vmem [shape: f32[2,12,32], index: 3, kind: output, shape index: {}]
  %s4 = sld [smem:[#allocation0]]
  $region45: #{tpu_custom_call.1} parent=0
    _
  %s6 = ssub.s32 1, %s4
  %s7 = scalar_select 0, %s6, %s4
  loop: start=0, step=1, limit=4
  $region2: #{tpu_custom_call.1} parent=0 // loop_pre_header
    _
  $region3: #{tpu_custom_call.1} parent=0 // loop_header
    %s9 = sphi 0, %s13
    %p10 = scmp.ge.s32.totalorder %s9, 4
    %s19 = sphi 0, %s21
    %s22 = sphi 0, %s19
    %s23 = sphi 0, %s22
    %s39 = sphi 0, %s23
    %s45 = sphi 0, %s47
    %s48 = sphi 0, %s45
    %s49 = sphi 0, %s48
    %s65 = sphi 0, %s49
    %s71 = sphi 0, %s73
    %s74 = sphi 0, %s71
    %s75 = sphi 0, %s74
    %s91 = sphi 0, %s75
    %s97 = sphi 0, %s99
    %s100 = sphi 0, %s97
    %s101 = sphi 0, %s100
    %s117 = sphi 0, %s101
  $region4: #{tpu_custom_call.1} parent=0 // loop_header_branch
    %12 = sbr.rel (%p10) target = $region8
  $region5: #{tpu_custom_call.1} parent=0 // loop_body
    %s14 = ssub.s32 %s9, 1
    %s15 = ssub.s32 %s9, 2
    %s16 = sadd.s32 %s9, 1
    %s17 = ssub.s32 %s9, %s16
    %p18 = scmp.eq.s32.totalorder %s17, 0
    %s20 = sadd.s32 %s19, 1
    %s21 = scalar_select %p18, %s19, %s20
    %p24 = pneg %p18
    %p25 = scmp.eq.s32.totalorder %s9, 1
    %p26 = por %p24, %p25
    %p27 = scmp.ne.s32.totalorder %s19, %s22
    %p28 = scmp.eq.s32.totalorder %s9, 0
    %p29 = por %p27, %p28
    %p30 = scmp.ne.s32.totalorder %s19, %s22
    %p31 = scmp.eq.s32.totalorder %s14, 1
    %p32 = por %p30, %p31
    %p33 = scmp.ne.s32.totalorder %s22, %s23
    %p34 = scmp.eq.s32.totalorder %s14, 0
    %p35 = por %p33, %p34
    %p36 = scmp.ne.s32.totalorder %s22, %s23
    %p37 = scmp.eq.s32.totalorder %s15, 1
    %p38 = por %p36, %p37
    %p40 = scmp.ne.s32.totalorder %s23, %s39
    %p41 = scmp.eq.s32.totalorder %s15, 0
    %p42 = por %p40, %p41
    %s43 = ssub.s32 %s9, %s16
    %p44 = scmp.eq.s32.totalorder %s43, 0
    %s46 = sadd.s32 %s45, 1
    %s47 = scalar_select %p44, %s45, %s46
    %p50 = pneg %p44
    %p51 = scmp.eq.s32.totalorder %s9, 1
    %p52 = por %p50, %p51
    %p53 = scmp.ne.s32.totalorder %s45, %s48
    %p54 = scmp.eq.s32.totalorder %s9, 0
    %p55 = por %p53, %p54
    %p56 = scmp.ne.s32.totalorder %s45, %s48
    %p57 = scmp.eq.s32.totalorder %s14, 1
    %p58 = por %p56, %p57
    %p59 = scmp.ne.s32.totalorder %s48, %s49
    %p60 = scmp.eq.s32.totalorder %s14, 0
    %p61 = por %p59, %p60
    %p62 = scmp.ne.s32.totalorder %s48, %s49
    %p63 = scmp.eq.s32.totalorder %s15, 1
    %p64 = por %p62, %p63
    %p66 = scmp.ne.s32.totalorder %s49, %s65
    %p67 = scmp.eq.s32.totalorder %s15, 0
    %p68 = por %p66, %p67
    %s69 = ssub.s32 %s9, %s16
    %p70 = scmp.eq.s32.totalorder %s69, 0
    %s72 = sadd.s32 %s71, 1
    %s73 = scalar_select %p70, %s71, %s72
    %p76 = pneg %p70
    %p77 = scmp.eq.s32.totalorder %s9, 1
    %p78 = por %p76, %p77
    %p79 = scmp.ne.s32.totalorder %s71, %s74
    %p80 = scmp.eq.s32.totalorder %s9, 0
    %p81 = por %p79, %p80
    %p82 = scmp.ne.s32.totalorder %s71, %s74
    %p83 = scmp.eq.s32.totalorder %s14, 1
    %p84 = por %p82, %p83
    %p85 = scmp.ne.s32.totalorder %s74, %s75
    %p86 = scmp.eq.s32.totalorder %s14, 0
    %p87 = por %p85, %p86
    %p88 = scmp.ne.s32.totalorder %s74, %s75
    %p89 = scmp.eq.s32.totalorder %s15, 1
    %p90 = por %p88, %p89
    %p92 = scmp.ne.s32.totalorder %s75, %s91
    %p93 = scmp.eq.s32.totalorder %s15, 0
    %p94 = por %p92, %p93
    %s95 = ssub.s32 %s9, %s16
    %p96 = scmp.eq.s32.totalorder %s95, 0
    %s98 = sadd.s32 %s97, 1
    %s99 = scalar_select %p96, %s97, %s98
    %p102 = pneg %p96
    %p103 = scmp.eq.s32.totalorder %s9, 1
    %p104 = por %p102, %p103
    %p105 = scmp.ne.s32.totalorder %s97, %s100
    %p106 = scmp.eq.s32.totalorder %s9, 0
    %p107 = por %p105, %p106
    %p108 = scmp.ne.s32.totalorder %s97, %s100
    %p109 = scmp.eq.s32.totalorder %s14, 1
    %p110 = por %p108, %p109
    %p111 = scmp.ne.s32.totalorder %s100, %s101
    %p112 = scmp.eq.s32.totalorder %s14, 0
    %p113 = por %p111, %p112
    %p114 = scmp.ne.s32.totalorder %s100, %s101
    %p115 = scmp.eq.s32.totalorder %s15, 1
    %p116 = por %p114, %p115
    %p118 = scmp.ne.s32.totalorder %s101, %s117
    %p119 = scmp.eq.s32.totalorder %s15, 0
    %p120 = por %p118, %p119
    %p121 = scmp.le.s32.totalorder 1, %s9
    %p122 = scmp.lt.s32.totalorder %s9, 3
    %p123 = pnand %p121, %p122
    %p124 = pneg %p123
    // Predicated region
    $region9: #{tpu_custom_call.1} parent=5 // pred_check
      _
    $region10: #{tpu_custom_call.1} parent=5 // pred_check_branch
      %126 = sbr.rel (%p123) target = $region12
    $region11: #{tpu_custom_call.1} parent=5 // pred_region
      %s127 = ssub.s32 %s9, 1
    $region12: #{tpu_custom_call.1} parent=5 // pred_fallthru
      _
    %p128 = scmp.lt.s32.totalorder %s9, 2
    // Predicated region
    $region13: #{tpu_custom_call.1} parent=5 // pred_check
      %p129 = pneg %p128
    $region14: #{tpu_custom_call.1} parent=5 // pred_check_branch
      %131 = sbr.rel (%p129) target = $region16
    $region15: #{tpu_custom_call.1} parent=5 // pred_region
      // Predicated region
      $region17: #{tpu_custom_call.1} parent=15 // pred_check
        %p132 = pneg %p29
      $region18: #{tpu_custom_call.1} parent=15 // pred_check_branch
        %134 = sbr.rel (%p132) target = $region20
      $region19: #{tpu_custom_call.1} parent=15 // pred_region
        %p135 = scmp.lt.s32.totalorder %s9, 1
        %s136 = scalar_select %p135, %s9, 1
        %s137 = smul.addr %s136, 2
        %s138 = smul.addr %s137, 4
        %s139 = scalar_lea.vmem %s0, %s138
      $region20: #{tpu_custom_call.1} parent=15 // pred_fallthru
        _
      // Predicated region
      $region21: #{tpu_custom_call.1} parent=15 // pred_check
        %p140 = pneg %p55
      $region22: #{tpu_custom_call.1} parent=15 // pred_check_branch
        %142 = sbr.rel (%p140) target = $region24
      $region23: #{tpu_custom_call.1} parent=15 // pred_region
        %p143 = scmp.lt.s32.totalorder %s9, 1
        %s144 = scalar_select %p143, %s9, 1
        %s145 = smul.addr %s144, 2
        %s146 = smul.addr %s145, 4
        %s147 = scalar_lea.vmem %s1, %s146
      $region24: #{tpu_custom_call.1} parent=15 // pred_fallthru
        _
      // Predicated region
      $region25: #{tpu_custom_call.1} parent=15 // pred_check
        %p148 = pneg %p81
      $region26: #{tpu_custom_call.1} parent=15 // pred_check_branch
        %150 = sbr.rel (%p148) target = $region28
      $region27: #{tpu_custom_call.1} parent=15 // pred_region
        %p151 = scmp.lt.s32.totalorder %s9, 1
        %s152 = scalar_select %p151, %s9, 1
        %s153 = scalar_lea.vmem %s2, %s152
      $region28: #{tpu_custom_call.1} parent=15 // pred_fallthru
        _
    $region16: #{tpu_custom_call.1} parent=5 // pred_fallthru
      _
    %p154 = scmp.le.s32.totalorder 1, %s9
    %p155 = scmp.lt.s32.totalorder %s9, 3
    %p156 = pnand %p154, %p155
    %p157 = pneg %p156
    // Predicated region
    $region29: #{tpu_custom_call.1} parent=5 // pred_check
      _
    $region30: #{tpu_custom_call.1} parent=5 // pred_check_branch
      %159 = sbr.rel (%p156) target = $region32
    $region31: #{tpu_custom_call.1} parent=5 // pred_region
      %s160 = ssub.s32 %s9, 1
      %p161 = scmp.lt.s32.totalorder %s14, 1
      %s162 = scalar_select %p161, %s14, 1
      %s163 = smul.addr %s162, 2
      %s164 = smul.addr %s163, 4
      %s165 = scalar_lea.vmem %s0, %s164
      %p166 = pneg %p35
      %p167 = pneg %p32
      %p168 = scmp.lt.s32.totalorder %s14, 1
      %s169 = scalar_select %p168, %s14, 1
      %s170 = smul.addr %s169, 2
      %s171 = smul.addr %s170, 4
      %s172 = scalar_lea.vmem %s1, %s171
      %p173 = pneg %p61
      %p174 = pneg %p58
      %p175 = scmp.lt.s32.totalorder %s14, 1
      %s176 = scalar_select %p175, %s14, 1
      %s177 = scalar_lea.vmem %s2, %s176
      %p178 = pneg %p87
      %p179 = pneg %p84
      %p180 = pneg %p113
      %p181 = pneg %p110
      %p182 = scmp.lt.s32.totalorder %s14, 1
      %s183 = scalar_select %p182, %s14, 1
      %s184 = smul.addr %s183, 2
      %s185 = smul.addr %s184, 8
      %s186 = scalar_lea.vmem %s3, %s185
      %p187 = scmp.lt.s32.totalorder %s14, 1
      %s188 = scalar_select %p187, %s14, 1
      %s189 = smul.addr %s188, 2
      %s190 = smul.addr %s189, 4
      %s191 = scalar_lea.vmem %s0, %s190
      %p192 = scmp.lt.s32.totalorder %s14, 1
      %s193 = scalar_select %p192, %s14, 1
      %s194 = smul.addr %s193, 2
      %s195 = smul.addr %s194, 4
      %s196 = scalar_lea.vmem %s1, %s195
      %p197 = scmp.lt.s32.totalorder %s14, 1
      %s198 = scalar_select %p197, %s14, 1
      %s199 = scalar_lea.vmem %s2, %s198
      %p200 = scmp.lt.s32.totalorder %s14, 1
      %s201 = scalar_select %p200, %s14, 1
      %s202 = smul.addr %s201, 2
      %s203 = smul.addr %s202, 8
      %s204 = scalar_lea.vmem %s3, %s203
      %v206 = vld [vmem:[%s191] sm:$0xf]
      %v207 = vld [vmem:[%s191 + $0x4] sm:$0x3]
      %v208 = vld [vmem:[%s196] sm:$0xf]
      %v209 = vld [vmem:[%s196 + $0x4] sm:$0x3]
      %v210 = vld [vmem:[%s199] sm:$0x1]
      %v212 = vlaneseq
      %v213 = vshrl.u32 %v212, 7
      %v214 = vsub.s32 0, %v213
      %v215 = vrot.slane %v210, %v214
      %v219 = vunpack.c.l.b16 %v206
      %v220 = vunpack.c.l.b16 %v207
      %v221 = vpack.c.b16 %v220, %v219
      %v224 = vunpack.c.l.b16 %v208
      %v225 = vunpack.c.l.b16 %v209
      %v226 = vpack.c.b16 %v225, %v224
      %vm227 = vcmask 97280
      %v229 = vsel %vm227, %v221, 0
      %vm231 = vcmask 1045504
      %v233 = vsel %vm231, %v226, 0
      %235 = vmatprep.subr.bf16.mxu0 0
      %236 = vmatpush1.bf16.msra.mxu0 %v233
      %237 = vmatprep.subr.bf16.mxu0 0
      %238 = vmatpush1.bf16.msra.mxu0 0
      %239 = vmatprep.subr.bf16.mxu0 0
      %240 = vmatpush1.bf16.msra.mxu0 0
      %241 = vmatprep.subr.bf16.mxu0 0
      %242 = vmatpush1.bf16.msra.mxu0 0
      %243 = vmatprep.subr.bf16.mxu0 0
      %244 = vmatpush1.bf16.msra.mxu0 0
      %245 = vmatprep.subr.bf16.mxu0 0
      %246 = vmatpush1.bf16.msra.mxu0 0
      %247 = vmatprep.subr.bf16.mxu0 0
      %248 = vmatpush1.bf16.msra.mxu0 0
      %249 = vmatprep.subr.bf16.mxu0 0
      %250 = vmatpush1.bf16.msra.mxu0 0
      %251 = vmatprep.subr.bf16.mxu0 0
      %252 = vmatpush1.bf16.msra.mxu0 0
      %253 = vmatprep.subr.bf16.mxu0 0
      %254 = vmatpush1.bf16.msra.mxu0 0
      %255 = vmatprep.subr.bf16.mxu0 0
      %256 = vmatpush1.bf16.msra.mxu0 0
      %257 = vmatprep.subr.bf16.mxu0 0
      %258 = vmatpush1.bf16.msra.mxu0 0
      %259 = vmatprep.subr.bf16.mxu0 0
      %260 = vmatpush1.bf16.msra.mxu0 0
      %261 = vmatprep.subr.bf16.mxu0 0
      %262 = vmatpush1.bf16.msra.mxu0 0
      %263 = vmatprep.subr.bf16.mxu0 0
      %264 = vmatpush1.bf16.msra.mxu0 0
      %265 = vmatprep.subr.bf16.mxu0 0
      %266 = vmatpush1.bf16.msra.mxu0 0
      %267 = vmatprep.mubr.bf16.mxu0 0
      %268 = vmatmul.mubr.bf16.gmra.mrb[0].mxu0 %v229
      %v269 = vpop.f32.mrb[0].mxu0
      %v270 = vadd.f32 %v215, %v269
      %v271 = vpop.f32.mrb[0].mxu0
      %v272 = vpop.f32.mrb[0].mxu0
      %v273 = vadd.f32 %v215, %v272
      %v274 = vpop.f32.mrb[0].mxu0
      %275 = vdwg.mxu0
      %vm276 = vcmask 261120
      %277 = vst.msk [vmem:[%s204] sm:$0xff] %vm276, %v270
      %vm278 = vcmask 257024
      %279 = vst.msk [vmem:[%s204 + $0x8] sm:$0xf] %vm278, %v273
      %p280 = scmp.lt.s32.totalorder %s14, 1
      %s281 = scalar_select %p280, %s14, 1
      %s282 = smul.addr %s281, 2
      %s283 = smul.addr %s282, 8
      %s284 = scalar_lea.vmem %s3, %s283
      // Predicated region
      $region33: #{tpu_custom_call.1} parent=31 // pred_check
        %p285 = pneg %p110
      $region34: #{tpu_custom_call.1} parent=31 // pred_check_branch
        %287 = sbr.rel (%p285) target = $region36
      $region35: #{tpu_custom_call.1} parent=31 // pred_region
        _
      $region36: #{tpu_custom_call.1} parent=31 // pred_fallthru
        _
    $region32: #{tpu_custom_call.1} parent=5 // pred_fallthru
      _
    %p288 = scmp.le.s32.totalorder 2, %s9
    // Predicated region
    $region37: #{tpu_custom_call.1} parent=5 // pred_check
      %p289 = pneg %p288
    $region38: #{tpu_custom_call.1} parent=5 // pred_check_branch
      %291 = sbr.rel (%p289) target = $region40
    $region39: #{tpu_custom_call.1} parent=5 // pred_region
      %s292 = ssub.s32 %s9, 2
      // Predicated region
      $region41: #{tpu_custom_call.1} parent=39 // pred_check
        %p293 = pneg %p116
      $region42: #{tpu_custom_call.1} parent=39 // pred_check_branch
        %295 = sbr.rel (%p293) target = $region44
      $region43: #{tpu_custom_call.1} parent=39 // pred_region
        %p296 = scmp.lt.s32.totalorder %s15, 1
        %s297 = scalar_select %p296, %s15, 1
        %s298 = smul.addr %s297, 2
        %s299 = smul.addr %s298, 8
        %s300 = scalar_lea.vmem %s3, %s299
      $region44: #{tpu_custom_call.1} parent=39 // pred_fallthru
        _
    $region40: #{tpu_custom_call.1} parent=5 // pred_fallthru
      _
  $region6: #{tpu_custom_call.1} parent=0 // loop_footer
    %s13 = sadd.s32 1, %s9
  $region7: #{tpu_custom_call.1} parent=0 // loop_footer_branch
    %8 = sbr.rel target = $region3
  $region8: #{tpu_custom_call.1} parent=0 // loop_exit
    _

</llo_original>
